<compile_context>
chip_gen: v6e
topology: v6e:2x2x1
jax: 0.10.0
libtpu: 0.0.40
codegen_flags: <defaults>
</compile_context>

<pallas_src>
import functools

import jax
import jax.numpy as jnp
from jax.experimental import pallas as pl
from jax.experimental.pallas import tpu as pltpu


def _layernorm_kernel(x_ref, a_ref, b_ref, o_ref, *, eps, features):
    # x_ref: (tile_rows, features); a_ref / b_ref: (1, features) — grid-invariant
    # (constant index_map), loaded and cast once per grid step.
    x = x_ref[...].astype(jnp.float32)
    mean = jnp.mean(x, axis=-1, keepdims=True)
    d = x - mean
    # Unbiased std (ddof=1), matching torch.Tensor.std default.
    # (features == 1 yields nan, same as torch.)
    var = jnp.sum(d * d, axis=-1, keepdims=True) / jnp.float32(features - 1)
    std = jnp.sqrt(var)
    # Exact reciprocal (EUP path), keeps the 1e-4 tolerance with headroom.
    inv = pl.reciprocal(std + jnp.float32(eps), approx=False)
    a = a_ref[...].astype(jnp.float32)
    b = b_ref[...].astype(jnp.float32)
    o_ref[...] = ((d * inv) * a + b).astype(o_ref.dtype)


def _round_up(n, m):
    return ((n + m - 1) // m) * m


def layernorm_pallas(x, a_2, b_2, eps=1e-06, tile_rows=None):
    """x: (..., features); a_2, b_2: (features,). Returns same shape/dtype as x."""
    orig_shape = x.shape
    features = orig_shape[-1]
    x2 = x.reshape(-1, features)
    rows = x2.shape[0]

    itemsize = jnp.dtype(x.dtype).itemsize
    # Sublane alignment: 8 rows for f32, 16 for bf16, 32 for 8-bit dtypes.
    sublane = max(8, 32 // itemsize)

    if tile_rows is None:
        # HBM-bandwidth-bound kernel: amortize the ~0.35 us per-grid-step
        # overhead with big tiles, but keep the double-buffered in+out tiles
        # (4 buffers total) within ~32 MiB so it fits every generation's VMEM
        # (v7x: 64 MiB physical per TensorCore).
        vmem_tile_budget = 32 * 1024 * 1024
        per_row_bytes = 4 * features * itemsize  # 2 input bufs + 2 output bufs
        tile_rows = min(1024, max(sublane, vmem_tile_budget // per_row_bytes))
    # Don't use tiles far larger than the problem; keep sublane alignment.
    tile_rows = min(int(tile_rows), _round_up(rows, sublane))
    tile_rows = max(sublane, _round_up(tile_rows, sublane))

    # Partial last block (if rows % tile_rows != 0) is handled by Pallas:
    # out-of-bounds reads are padded, out-of-bounds writes are masked, and the
    # per-row reduction over features is unaffected by the padded rows.
    grid = (pl.cdiv(rows, tile_rows),)

    a2 = a_2.reshape(1, features)
    b2 = b_2.reshape(1, features)

    kernel = functools.partial(_layernorm_kernel, eps=eps, features=features)

    # Explicit scoped-VMEM limit: above the 16/32 MiB defaults so the large
    # tiles fit, but safely below every generation's physical VMEM.
    vmem_limit = 48 * 1024 * 1024

    out = pl.pallas_call(
        kernel,
        out_shape=jax.ShapeDtypeStruct((rows, features), x.dtype),
        grid_spec=pltpu.PrefetchScalarGridSpec(
            num_scalar_prefetch=0,
            grid=grid,
            in_specs=[
                pl.BlockSpec((tile_rows, features), lambda i: (i, 0)),
                pl.BlockSpec((1, features), lambda i: (0, 0)),
                pl.BlockSpec((1, features), lambda i: (0, 0)),
            ],
            out_specs=pl.BlockSpec((tile_rows, features), lambda i: (i, 0)),
        ),
        compiler_params=pltpu.CompilerParams(
            dimension_semantics=("parallel",),
            vmem_limit_bytes=vmem_limit,
        ),
    )(x2, a2, b2)

    return out.reshape(orig_shape)


if __name__ == "__main__":
    # Deterministic parameters, matching nn.Parameter(torch.ones/zeros(features)).
    # hidden=256 keeps the lane axis dense (multiple of 128) and matches a
    # typical nulog d_model while staying small.
    batch, seq, hidden = 2, 8, 256
    a_2 = jnp.ones((hidden,), jnp.float32)
    b_2 = jnp.zeros((hidden,), jnp.float32)

    key = jax.random.PRNGKey(0)
    x = jax.random.normal(key, (batch, seq, hidden), dtype=jnp.float32)

    y = layernorm_pallas(x, a_2, b_2, eps=1e-06)
    y = jax.block_until_ready(y)

    # Reference check (pure JAX, same semantics as the PyTorch module).
    mean = jnp.mean(x, axis=-1, keepdims=True)
    std = jnp.sqrt(jnp.sum((x - mean) ** 2, axis=-1, keepdims=True) / (hidden - 1))
    ref = a_2 * (x - mean) / (std + 1e-06) + b_2
    assert jnp.max(jnp.abs(y - ref)) < 1e-4, "mismatch vs reference"

    # Also exercise a non-multiple-of-tile row count (partial last block path).
    x_odd = jax.random.normal(jax.random.PRNGKey(1), (3, 7, hidden), jnp.float32)
    y_odd = jax.block_until_ready(layernorm_pallas(x_odd, a_2, b_2, eps=1e-06))
    mean_o = jnp.mean(x_odd, axis=-1, keepdims=True)
    std_o = jnp.sqrt(
        jnp.sum((x_odd - mean_o) ** 2, axis=-1, keepdims=True) / (hidden - 1)
    )
    ref_o = a_2 * (x_odd - mean_o) / (std_o + 1e-06) + b_2
    assert jnp.max(jnp.abs(y_odd - ref_o)) < 1e-4, "mismatch vs reference (ragged)"

    print("KERNEL_OK")
</pallas_src>

<mosaic_0001>
module attributes {stable_mosaic.version = 11 : i64} {
  func.func @_layernorm_kernel(%arg0: i32, %arg1: memref<16x256xf32, #tpu.memory_space<vmem>>, %arg2: memref<1x256xf32, #tpu.memory_space<vmem>>, %arg3: memref<1x256xf32, #tpu.memory_space<vmem>>, %arg4: memref<16x256xf32, #tpu.memory_space<vmem>>) attributes {dimension_semantics = [#tpu.dimension_semantics<parallel>], iteration_bounds = array<i64: 1>, scalar_prefetch = 0 : i64, scratch_operands = 0 : i64, tpu.core_type = #tpu.core_type<tc>, window_params = [{transform_indices = @transform_0, window_bounds = array<i64: 16, 256>}, {pipeline_mode = #tpu.pipeline_mode<synchronous>, transform_indices = @transform_1, window_bounds = array<i64: 1, 256>}, {pipeline_mode = #tpu.pipeline_mode<synchronous>, transform_indices = @transform_2, window_bounds = array<i64: 1, 256>}, {transform_indices = @transform_3, window_bounds = array<i64: 16, 256>}]} {
    %c0 = arith.constant 0 : index
    %c0_0 = arith.constant 0 : index
    %0 = vector.load %arg1[%c0, %c0_0] : memref<16x256xf32, #tpu.memory_space<vmem>>, vector<16x256xf32>
    %cst = arith.constant dense<0.000000e+00> : vector<16xf32>
    %1 = vector.multi_reduction <add>, %0, %cst [1] : vector<16x256xf32> to vector<16xf32>
    %2 = vector.shape_cast %1 : vector<16xf32> to vector<16x1xf32>
    %cst_1 = arith.constant 2.560000e+02 : f32
    %3 = vector.broadcast %cst_1 : f32 to vector<16x1xf32>
    %4 = arith.divf %2, %3 : vector<16x1xf32>
    %5 = vector.broadcast %4 : vector<16x1xf32> to vector<16x256xf32>
    %6 = arith.subf %0, %5 : vector<16x256xf32>
    %7 = arith.mulf %6, %6 : vector<16x256xf32>
    %cst_2 = arith.constant dense<0.000000e+00> : vector<16xf32>
    %8 = vector.multi_reduction <add>, %7, %cst_2 [1] : vector<16x256xf32> to vector<16xf32>
    %9 = vector.shape_cast %8 : vector<16xf32> to vector<16x1xf32>
    %cst_3 = arith.constant 2.550000e+02 : f32
    %10 = vector.broadcast %cst_3 : f32 to vector<16x1xf32>
    %11 = arith.divf %9, %10 : vector<16x1xf32>
    %12 = math.sqrt %11 : vector<16x1xf32>
    %cst_4 = arith.constant 9.99999997E-7 : f32
    %13 = vector.broadcast %cst_4 : f32 to vector<16x1xf32>
    %14 = arith.addf %12, %13 : vector<16x1xf32>
    %15 = tpu.reciprocal %14 : vector<16x1xf32> -> vector<16x1xf32>
    %c0_5 = arith.constant 0 : index
    %c0_6 = arith.constant 0 : index
    %16 = vector.load %arg2[%c0_5, %c0_6] : memref<1x256xf32, #tpu.memory_space<vmem>>, vector<1x256xf32>
    %c0_7 = arith.constant 0 : index
    %c0_8 = arith.constant 0 : index
    %17 = vector.load %arg3[%c0_7, %c0_8] : memref<1x256xf32, #tpu.memory_space<vmem>>, vector<1x256xf32>
    %18 = vector.broadcast %15 : vector<16x1xf32> to vector<16x256xf32>
    %19 = arith.mulf %6, %18 : vector<16x256xf32>
    %20 = vector.broadcast %16 : vector<1x256xf32> to vector<16x256xf32>
    %21 = arith.mulf %19, %20 : vector<16x256xf32>
    %22 = vector.broadcast %17 : vector<1x256xf32> to vector<16x256xf32>
    %23 = arith.addf %21, %22 : vector<16x256xf32>
    %c0_9 = arith.constant 0 : index
    %c0_10 = arith.constant 0 : index
    %24 = vector.load %arg4[%c0_9, %c0_10] : memref<16x256xf32, #tpu.memory_space<vmem>>, vector<16x256xf32>
    tpu.vector_store %arg4[%c0_9, %c0_10], %23 {strides = array<i32>} : memref<16x256xf32, #tpu.memory_space<vmem>>, vector<16x256xf32>,
    return
  }
  func.func @transform_0(%arg0: i32) -> (i32, i32) {
    %c0_i32 = arith.constant 0 : i32
    %c0_i32_0 = arith.constant 0 : i32
    return %arg0, %c0_i32 : i32, i32
  }
  func.func @transform_1(%arg0: i32) -> (i32, i32) {
    %c0_i32 = arith.constant 0 : i32
    %c0_i32_0 = arith.constant 0 : i32
    %c0_i32_1 = arith.constant 0 : i32
    return %c0_i32, %c0_i32_0 : i32, i32
  }
  func.func @transform_2(%arg0: i32) -> (i32, i32) {
    %c0_i32 = arith.constant 0 : i32
    %c0_i32_0 = arith.constant 0 : i32
    %c0_i32_1 = arith.constant 0 : i32
    return %c0_i32, %c0_i32_0 : i32, i32
  }
  func.func @transform_3(%arg0: i32) -> (i32, i32) {
    %c0_i32 = arith.constant 0 : i32
    %c0_i32_0 = arith.constant 0 : i32
    return %arg0, %c0_i32 : i32, i32
  }
}

</mosaic_0001>

<llo_original>
// kernel: tpu_custom_call.1
$region0: #{tpu_custom_call.1}
  #allocation0 [shape = 'u32[]', space=smem, size = 0x4, offset = 0x4, fixed_abs, tag = 'smem constant byte address 0x4 - core index']
  #allocation1 [shape = 'u32[144,128]{1,0:T(1,128)}', space=vmem, size = 0x12000, scoped, tag = 'internal scratch']
  %s0 = inlined_call_operand.hbm [shape: f32[16,256], index: 0, kind: input, shape index: {}]
  %s1 = inlined_call_operand.hbm [shape: f32[1,256], index: 1, kind: input, shape index: {}]
  %s2 = inlined_call_operand.vmem [shape: f32[1,256], index: 2, kind: input, shape index: {}]
  %s3 = inlined_call_operand.hbm [shape: f32[16,256], index: 3, kind: output, shape index: {}]
  %s4 = sld [smem:[#allocation0]]
  $region30: #{tpu_custom_call.1} parent=0
    _
  %s6 = ssub.s32 1, %s4
  %s7 = scalar_select 0, %s6, %s4
  $region1: #{tpu_custom_call.1} parent=0
    #allocation2 [shape = 'u8[16384]{0}', space=vmem, size = 0x4000, scoped, tag = 'input window, operand 0, single buffered']
    #allocation3 [shape = 's32[1]{0}', space=sflag, size = 0x4, scoped, tag = 'scoped memory for tpu_custom_call.1']
    #allocation4 [shape = 's32[1]{0}', space=sflag, size = 0x4, scoped, tag = 'scoped memory for tpu_custom_call.1']
    #allocation5 [shape = 'u8[1024]{0}', space=vmem, size = 0x400, scoped, tag = 'input window, operand 1, single buffered']
    #allocation6 [shape = 's32[1]{0}', space=sflag, size = 0x4, scoped, tag = 'scoped memory for tpu_custom_call.1']
    #allocation7 [shape = 'u8[16384]{0}', space=vmem, size = 0x4000, scoped, tag = 'output window, operand 0, single buffered']
    %8 = vsyncpa [#allocation3], 0
    %9 = vsyncpa [#allocation6], 0
    %10 = vsyncpa [#allocation4], 0
    // Predicated region
    $region2: #{tpu_custom_call.1} parent=1 // pred_check
      _
    $region3: #{tpu_custom_call.1} parent=1 // pred_check_branch
      %12 = sbr.rel (0) target = $region5
    $region4: #{tpu_custom_call.1} parent=1 // pred_region
      %s14 = ssub.s32 512, 512
      %15 = vsyncadd [#allocation3], %s14
      %s16 = sshll.u32 [#allocation2], 4
      %s17 = int_to_ptr.vmem [resolvable:$true] %s16
      %22 = dma.hbm_to_vmem [thread:$0]  %s0, 512, %s17, [#allocation3], 256, 256, 16
    $region5: #{tpu_custom_call.1} parent=1 // pred_fallthru
      _
    // Predicated region
    $region6: #{tpu_custom_call.1} parent=1 // pred_check
      _
    $region7: #{tpu_custom_call.1} parent=1 // pred_check_branch
      %24 = sbr.rel (0) target = $region9
    $region8: #{tpu_custom_call.1} parent=1 // pred_region
      %s26 = ssub.s32 32, 32
      %27 = vsyncadd [#allocation6], %s26
      %s29 = sshll.u32 [#allocation5], 4
      %s30 = int_to_ptr.vmem [resolvable:$true] %s29
      %32 = dma.hbm_to_vmem [thread:$0]  %s1, 32, %s30, [#allocation6]
    $region9: #{tpu_custom_call.1} parent=1 // pred_fallthru
      _
    // Predicated region
    $region10: #{tpu_custom_call.1} parent=1 // pred_check
      _
    $region11: #{tpu_custom_call.1} parent=1 // pred_check_branch
      %34 = sbr.rel (0) target = $region13
    $region12: #{tpu_custom_call.1} parent=1 // pred_region
      _
    $region13: #{tpu_custom_call.1} parent=1 // pred_fallthru
      _
    // Predicated region
    $region14: #{tpu_custom_call.1} parent=1 // pred_check
      _
    $region15: #{tpu_custom_call.1} parent=1 // pred_check_branch
      %36 = sbr.rel (0) target = $region17
    $region16: #{tpu_custom_call.1} parent=1 // pred_region
      %37 = dma.done [#allocation3], 512
    $region17: #{tpu_custom_call.1} parent=1 // pred_fallthru
      _
    // Predicated region
    $region18: #{tpu_custom_call.1} parent=1 // pred_check
      _
    $region19: #{tpu_custom_call.1} parent=1 // pred_check_branch
      %39 = sbr.rel (0) target = $region21
    $region20: #{tpu_custom_call.1} parent=1 // pred_region
      %40 = dma.done [#allocation6], 32
    $region21: #{tpu_custom_call.1} parent=1 // pred_fallthru
      _
    %v41 = vld [vmem:[#allocation2] sm:$0xff]
    %v42 = vld [vmem:[#allocation2 + $0x8] sm:$0xff]
    %v43 = vld [vmem:[#allocation2 + $0x10] sm:$0xff]
    %v44 = vld [vmem:[#allocation2 + $0x18] sm:$0xff]
    %v45 = vadd.f32 %v41, %v42
    %46 = vadd.xlane.f32.xlu0 %v45
    %v47 = vpop.xlane.xlu0 %46
    %v48 = vadd.f32 %v43, %v44
    %49 = vadd.xlane.f32.xlu0 %v48
    %v50 = vpop.xlane.xlu0 %49
    %v51 = vrcp.pop 256.0
    %v52 = vmul.f32 %v47, %v51
    %v53 = vmul.f32 %v50, %v51
    %v54 = vsub.f32 %v41, %v52
    %v55 = vsub.f32 %v42, %v52
    %v56 = vsub.f32 %v43, %v53
    %v57 = vsub.f32 %v44, %v53
    %v58 = vmul.f32 %v54, %v54
    %v59 = vmul.f32 %v55, %v55
    %v60 = vmul.f32 %v56, %v56
    %v61 = vmul.f32 %v57, %v57
    %v62 = vadd.f32 %v58, %v59
    %63 = vadd.xlane.f32.xlu0 %v62
    %v64 = vpop.xlane.xlu0 %63
    %v65 = vadd.f32 %v60, %v61
    %66 = vadd.xlane.f32.xlu0 %v65
    %v67 = vpop.xlane.xlu0 %66
    %v68 = vrcp.pop 255.0
    %v69 = vmul.f32 %v64, %v68
    %v70 = vmul.f32 %v67, %v68
    %v71 = vrsqrt.pop %v69
    %v72 = vmul.f32 %v69, %v71
    %vm73 = vcmp.eq.f32.partialorder %v69, inf
    %v74 = vsel %vm73, %v69, %v72
    %vm75 = vcmp.eq.f32.partialorder %v69, 0.0
    %v76 = vand.u32 %v69, 2147483648
    %v77 = vsel %vm75, %v76, %v74
    %v78 = vrsqrt.pop %v70
    %v79 = vmul.f32 %v70, %v78
    %vm80 = vcmp.eq.f32.partialorder %v70, inf
    %v81 = vsel %vm80, %v70, %v79
    %vm82 = vcmp.eq.f32.partialorder %v70, 0.0
    %v83 = vand.u32 %v70, 2147483648
    %v84 = vsel %vm82, %v83, %v81
    %v85 = vadd.f32 %v77, 1e-06
    %v86 = vadd.f32 %v84, 1e-06
    %v87 = vrcp.pop %v85
    %v88 = vrcp.pop %v86
    %v89 = vld [vmem:[#allocation5] sm:$0x3]
    %v90 = vld [vmem:[%s2] sm:$0x3]
    %v91 = vmul.f32 %v54, %v87
    %v92 = vmul.f32 %v55, %v87
    %v93 = vmul.f32 %v56, %v88
    %v94 = vmul.f32 %v57, %v88
    %v96 = vlaneseq
    %v97 = vshrl.u32 %v96, 7
    %v98 = vsub.s32 0, %v97
    %v99 = vrot.slane %v89, %v98
    %v100 = vlaneseq
    %v101 = vshrl.u32 %v100, 7
    %v102 = vsub.s32 1, %v101
    %v103 = vrot.slane %v89, %v102
    %v106 = vmul.f32 %v91, %v99
    %v107 = vmul.f32 %v92, %v103
    %v108 = vmul.f32 %v93, %v99
    %v109 = vmul.f32 %v94, %v103
    %v111 = vlaneseq
    %v112 = vshrl.u32 %v111, 7
    %v113 = vsub.s32 0, %v112
    %v114 = vrot.slane %v90, %v113
    %v115 = vlaneseq
    %v116 = vshrl.u32 %v115, 7
    %v117 = vsub.s32 1, %v116
    %v118 = vrot.slane %v90, %v117
    %v121 = vadd.f32 %v106, %v114
    %v122 = vadd.f32 %v107, %v118
    %v123 = vadd.f32 %v108, %v114
    %v124 = vadd.f32 %v109, %v118
    %125 = vst [vmem:[#allocation7] sm:$0xff] %v121
    %126 = vst [vmem:[#allocation7 + $0x8] sm:$0xff] %v122
    %127 = vst [vmem:[#allocation7 + $0x10] sm:$0xff] %v123
    %128 = vst [vmem:[#allocation7 + $0x18] sm:$0xff] %v124
    // Predicated region
    $region22: #{tpu_custom_call.1} parent=1 // pred_check
      _
    $region23: #{tpu_custom_call.1} parent=1 // pred_check_branch
      %130 = sbr.rel (0) target = $region25
    $region24: #{tpu_custom_call.1} parent=1 // pred_region
      %s132 = ssub.s32 512, 512
      %133 = vsyncadd [#allocation4], %s132
      %s134 = sshll.u32 [#allocation7], 4
      %s135 = int_to_ptr.vmem [resolvable:$true] %s134
      %140 = dma.vmem_to_hbm [thread:$0]  %s135, 512, %s3, [#allocation4], 256, 256, 16
    $region25: #{tpu_custom_call.1} parent=1 // pred_fallthru
      _
    // Predicated region
    $region26: #{tpu_custom_call.1} parent=1 // pred_check
      _
    $region27: #{tpu_custom_call.1} parent=1 // pred_check_branch
      %142 = sbr.rel (0) target = $region29
    $region28: #{tpu_custom_call.1} parent=1 // pred_region
      %143 = dma.done [#allocation4], 512
    $region29: #{tpu_custom_call.1} parent=1 // pred_fallthru
      _
    %144 = vsyncpa [#allocation3], 1
    %145 = vsyncpa [#allocation6], 1
    %146 = vsyncpa [#allocation4], 1

</llo_original>
